<compile_context>
chip_gen: v7x
topology: tpu7x:2x2x1
jax: 0.10.0
libtpu: 0.0.40
codegen_flags: <defaults>
</compile_context>

<pallas_src>
import functools

import jax
import jax.numpy as jnp
from jax.experimental import pallas as pl
from jax.experimental.pallas import tpu as pltpu


def _attention_ntk_kernel(x_ref, w_all_ref, w_read_ref, blk_bias_ref, mask_ref,
                          fill_ref, out_ref, *, H, d0, d2, use_bf16):
    TB, Lp, d = x_ref.shape
    C = 2 * d0 + d2
    HL = H * Lp
    neg = jnp.float32(-1e9)
    mm_dtype = jnp.bfloat16 if use_bf16 else jnp.float32

    # ---- fused Q/K/V projection, all heads in one MXU matmul ----
    xf = x_ref[...].reshape(TB * Lp, d)
    proj = jnp.dot(xf.astype(mm_dtype), w_all_ref[...].astype(mm_dtype),
                   preferred_element_type=jnp.float32)
    proj = proj.reshape(TB, Lp, H * C)

    # ---- head-major lanes -> block layout (TB, H*Lp, C) ----
    # H sublane placements (one 24-lane group per head) replace the old
    # 3*H per-head 8-lane slices.
    qkv = jnp.concatenate(
        [proj[:, :, h * C:(h + 1) * C] for h in range(H)], axis=1)
    q = qkv[:, :, :d0]                   # already scaled by 1/sqrt(d0) (in W)
    k = qkv[:, :, d0:2 * d0]
    v = qkv[:, :, 2 * d0:]

    # ---- single block-diagonal attention for all heads ----
    s = jnp.einsum('bre,bse->brs', q.astype(mm_dtype), k.astype(mm_dtype),
                   preferred_element_type=jnp.float32)       # (TB, HL, HL)

    # Additive biases, built once (hoisted out of any per-head work):
    #   static -1e9 on cross-head blocks; -1e9 on invalid keys.
    valid = mask_ref[...] > 0                                 # (TB, Lp)
    key_bias = jnp.tile(jnp.where(valid, jnp.float32(0.0), neg), (1, H))
    s = s + blk_bias_ref[...][None, :, :] + key_bias[:, None, :]

    # Unnormalized softmax; normalization deferred past the PV matmul.
    s_max = jnp.max(s, axis=-1, keepdims=True)
    p = jnp.exp(s - s_max)
    denom = jnp.sum(p, axis=-1, keepdims=True)                # (TB, HL, 1)
    o = jnp.einsum('brs,bse->bre', p.astype(mm_dtype), v.astype(mm_dtype),
                   preferred_element_type=jnp.float32)        # (TB, HL, d2)

    # ---- readout (1/sqrt(H) folded into w_read); fold heads into (TB, Lp) ----
    # TODO(synk): exact divide kept instead of pl.reciprocal(approx=True).
    o = o * w_read_ref[...] * (1.0 / denom)
    logits = jnp.sum(jnp.sum(o.reshape(TB, H, Lp, d2), axis=1), axis=-1)

    # ---- item-level masked_fill (exact -1e9, -2e9 on padded cols) + softmax ----
    logits = jnp.where(valid, logits, fill_ref[...])
    l_max = jnp.max(logits, axis=-1, keepdims=True)
    e = jnp.exp(logits - l_max)
    out_ref[...] = e / jnp.sum(e, axis=-1, keepdims=True)


def _choose_block_b(B, Lp, d, H, d0, d2, budget_bytes):
    """Largest batch tile (multiple of 8) whose estimated VMEM footprint fits
    the budget, capped at half the batch so the parallel grid axis keeps at
    least two tiles (feeds both TensorCores on v7x)."""
    C = 2 * d0 + d2
    n_proj = H * C
    HL = H * Lp
    # Bytes per batch row in the tile:
    #   double-buffered pipelined blocks (X, mask, out)
    #   + live fp32 temporaries (proj, qkv, s/p (+slack), o, logits).
    per_row = (2 * (Lp * d + 2 * Lp)
               + Lp * n_proj + HL * C + 3 * HL * HL + 2 * HL * d2 + 8 * Lp) * 4
    # Batch-independent residents (fused weights, readout, block bias), x2 bufs.
    const = 2 * (d * n_proj + HL * d2 + HL * HL + Lp) * 4
    if B <= 8:
        return B
    tb_fit = max(8, (budget_bytes - const) // per_row // 8 * 8)
    bp8 = ((B + 7) // 8) * 8
    tb_cap = max(8, (bp8 // 2) // 8 * 8)
    return int(min(tb_fit, tb_cap))


def attention_ntk_forward(X, mask, theta1, theta2, theta3, w, *, H, d0,
                          block_b=None, use_bf16=False):
    """X: (B, L, d) f32; mask: (B, L) bool; theta*: PyTorch Linear layout
    (out_features, in_features); w: (H, d2).  Returns probs (B, L) f32."""
    B, L, d = X.shape
    d2 = theta3.shape[0] // H
    C = 2 * d0 + d2
    f32 = jnp.float32

    # Pad L to a sublane multiple so the in-kernel (TB, Lp, .)<->(TB*Lp, .) and
    # (TB, H*Lp, .)<->(TB, H, Lp, .) reshapes are layout-preserving.
    Lp = ((L + 7) // 8) * 8
    HL = H * Lp
    n_proj = H * C

    # Per-generation VMEM budget (64 MiB fallback covers v7x's smaller VMEM).
    try:
        vmem_phys = int(getattr(pltpu.get_tpu_info(), "vmem_capacity_bytes",
                                64 * 1024 * 1024))
    except Exception:
        vmem_phys = 64 * 1024 * 1024
    vmem_limit = min(vmem_phys * 7 // 8, 112 * 1024 * 1024)

    if block_b is None:
        block_b = _choose_block_b(B, Lp, d, H, d0, d2, vmem_limit * 3 // 4)
    Bp = ((B + block_b - 1) // block_b) * block_b

    Xp = jnp.zeros((Bp, Lp, d), f32).at[:B, :L, :].set(X.astype(f32))
    mask_f = jnp.zeros((Bp, Lp), f32).at[:B, :L].set(mask.astype(f32))

    # Head-major fused projection weights (pre-transposed, scales folded in).
    t1 = theta1.astype(f32).T / jnp.sqrt(f32(d0))             # (d, H*d0)
    t2 = theta2.astype(f32).T                                  # (d, H*d0)
    t3 = theta3.astype(f32).T                                  # (d, H*d2)
    w_all = jnp.concatenate(
        [jnp.concatenate([t1[:, h * d0:(h + 1) * d0],
                          t2[:, h * d0:(h + 1) * d0],
                          t3[:, h * d2:(h + 1) * d2]], axis=1)
         for h in range(H)], axis=1)                           # (d, H*C)

    # Readout weights repeated per item row; 1/sqrt(H) folded in.
    w_read = (jnp.repeat(w.astype(f32), Lp, axis=0)
              / jnp.sqrt(f32(H))).reshape(1, HL, d2)

    # Static additive bias killing cross-head blocks of the fused score matrix.
    head_id = jnp.arange(HL, dtype=jnp.int32) // Lp
    blk_bias = jnp.where(head_id[:, None] == head_id[None, :],
                         f32(0.0), f32(-1e9))                  # (HL, HL)

    # masked_fill values for the item logits: exactly -1e9 for real items
    # (matches torch even when a whole sequence is masked), -2e9 for padded
    # columns so they never contribute to the item softmax.
    item_fill = jnp.full((1, Lp), -1e9, f32).at[:, L:].set(f32(-2e9))

    grid = (Bp // block_b,)
    kernel = functools.partial(_attention_ntk_kernel, H=H, d0=d0, d2=d2,
                               use_bf16=use_bf16)

    out = pl.pallas_call(
        kernel,
        out_shape=jax.ShapeDtypeStruct((Bp, Lp), f32),
        grid_spec=pltpu.PrefetchScalarGridSpec(
            num_scalar_prefetch=0,
            grid=grid,
            in_specs=[
                # X tile; on v5e consider pipeline_mode=pl.Buffered(3) here if
                # DMA becomes exposed after the compute-side fixes.
                pl.BlockSpec((block_b, Lp, d), lambda b: (b, 0, 0)),
                pl.BlockSpec((d, n_proj), lambda b: (0, 0)),       # fused W (resident)
                pl.BlockSpec((1, HL, d2), lambda b: (0, 0, 0)),    # readout (resident)
                pl.BlockSpec((HL, HL), lambda b: (0, 0)),          # block bias (resident)
                pl.BlockSpec((block_b, Lp), lambda b: (b, 0)),     # item mask
                pl.BlockSpec((1, Lp), lambda b: (0, 0)),           # fill values (resident)
            ],
            out_specs=pl.BlockSpec((block_b, Lp), lambda b: (b, 0)),
        ),
        compiler_params=pltpu.CompilerParams(
            dimension_semantics=("parallel",),
            vmem_limit_bytes=int(vmem_limit)),
    )(Xp, w_all, w_read, blk_bias, mask_f, item_fill)
    return out[:B, :L]


def attention_ntk_reference(X, mask, theta1, theta2, theta3, w, *, H, d0):
    """Pure-JAX reference mirroring the PyTorch forward exactly."""
    B, L, d = X.shape
    d2 = w.shape[-1]
    Q = (X @ theta1.T).reshape(B, L, H, d0)
    K = (X @ theta2.T).reshape(B, L, H, d0)
    V = (X @ theta3.T).reshape(B, L, H, d2)
    scores = jnp.einsum('blhd,bmhd->bhlm', Q, K) / jnp.sqrt(jnp.float32(d0))
    attn_mask = mask[:, None, None, :] & mask[:, None, :, None]
    scores = jnp.where(attn_mask, scores, -1e9)
    attn = jax.nn.softmax(scores, axis=-1)
    outputs = jnp.einsum('bhlm,bmhd->blhd', attn, V)
    v = jnp.einsum('blhd,hd->bl', outputs, w) / jnp.sqrt(jnp.float32(H))
    v = jnp.where(mask, v, -1e9)
    return jax.nn.softmax(v, axis=-1)


if __name__ == "__main__":
    # Small, module-consistent shapes.
    B, L, d = 2, 8, 16          # batch, max_items, feature dim
    H, d0, d2 = 4, 8, 8         # heads, qk dim, value dim
    sigma = 1.0

    key = jax.random.PRNGKey(0)
    kx, k1, k2, k3, kw = jax.random.split(key, 5)

    X = jax.random.normal(kx, (B, L, d), dtype=jnp.float32)
    theta1 = sigma * jax.random.normal(k1, (H * d0, d), dtype=jnp.float32)
    theta2 = sigma * jax.random.normal(k2, (H * d0, d), dtype=jnp.float32)
    theta3 = sigma * jax.random.normal(k3, (H * d2, d), dtype=jnp.float32)
    w = sigma * jax.random.normal(kw, (H, d2), dtype=jnp.float32)

    # Mask from cardinalities (first `card` items valid per sequence).
    cardinality = jnp.array([8, 5], dtype=jnp.int32)
    mask = jnp.arange(L)[None, :] < cardinality[:, None]       # (B, L) bool

    probs = attention_ntk_forward(X, mask, theta1, theta2, theta3, w, H=H, d0=d0)
    jax.block_until_ready(probs)

    ref = attention_ntk_reference(X, mask, theta1, theta2, theta3, w, H=H, d0=d0)
    assert probs.shape == (B, L)
    assert jnp.allclose(probs, ref, atol=5e-5, rtol=1e-5), (
        f"max abs err {jnp.max(jnp.abs(probs - ref))}")

    print("KERNEL_OK")
</pallas_src>

<mosaic_0001>
module attributes {stable_mosaic.version = 11 : i64} {
  func.func @_attention_ntk_kernel(%arg0: i32, %arg1: memref<2x8x16xf32, #tpu.memory_space<vmem>>, %arg2: memref<16x96xf32, #tpu.memory_space<vmem>>, %arg3: memref<1x32x8xf32, #tpu.memory_space<vmem>>, %arg4: memref<32x32xf32, #tpu.memory_space<vmem>>, %arg5: memref<2x8xf32, #tpu.memory_space<vmem>>, %arg6: memref<1x8xf32, #tpu.memory_space<vmem>>, %arg7: memref<2x8xf32, #tpu.memory_space<vmem>>) attributes {dimension_semantics = [#tpu.dimension_semantics<parallel>], iteration_bounds = array<i64: 1>, scalar_prefetch = 0 : i64, scratch_operands = 0 : i64, tpu.core_type = #tpu.core_type<tc>, window_params = [{transform_indices = @transform_0, window_bounds = array<i64: 2, 8, 16>}, {pipeline_mode = #tpu.pipeline_mode<synchronous>, transform_indices = @transform_1, window_bounds = array<i64: 16, 96>}, {pipeline_mode = #tpu.pipeline_mode<synchronous>, transform_indices = @transform_2, window_bounds = array<i64: 1, 32, 8>}, {pipeline_mode = #tpu.pipeline_mode<synchronous>, transform_indices = @transform_3, window_bounds = array<i64: 32, 32>}, {transform_indices = @transform_4, window_bounds = array<i64: 2, 8>}, {pipeline_mode = #tpu.pipeline_mode<synchronous>, transform_indices = @transform_5, window_bounds = array<i64: 1, 8>}, {transform_indices = @transform_6, window_bounds = array<i64: 2, 8>}]} {
    %c0 = arith.constant 0 : index
    %c0_0 = arith.constant 0 : index
    %c0_1 = arith.constant 0 : index
    %0 = vector.load %arg1[%c0, %c0_0, %c0_1] : memref<2x8x16xf32, #tpu.memory_space<vmem>>, vector<2x8x16xf32>
    %1 = vector.shape_cast %0 : vector<2x8x16xf32> to vector<16x16xf32>
    %c0_2 = arith.constant 0 : index
    %c0_3 = arith.constant 0 : index
    %2 = vector.load %arg2[%c0_2, %c0_3] : memref<16x96xf32, #tpu.memory_space<vmem>>, vector<16x96xf32>
    %cst = arith.constant dense<0.000000e+00> : vector<16x96xf32>
    %3 = tpu.matmul %1, %2, %cst {dimension_numbers = #tpu.dot_dimension_numbers<[1], [0], [0], [1], [0, 0, 1, 1], [], []>} : vector<16x16xf32>, vector<16x96xf32>, vector<16x96xf32> -> vector<16x96xf32>
    %4 = vector.shape_cast %3 : vector<16x96xf32> to vector<2x8x96xf32>
    %5 = vector.extract_strided_slice %4 {offsets = [0, 0, 0], sizes = [2, 8, 24], strides = [1, 1, 1]} : vector<2x8x96xf32> to vector<2x8x24xf32>
    %6 = vector.extract_strided_slice %4 {offsets = [0, 0, 24], sizes = [2, 8, 24], strides = [1, 1, 1]} : vector<2x8x96xf32> to vector<2x8x24xf32>
    %7 = vector.extract_strided_slice %4 {offsets = [0, 0, 48], sizes = [2, 8, 24], strides = [1, 1, 1]} : vector<2x8x96xf32> to vector<2x8x24xf32>
    %8 = vector.extract_strided_slice %4 {offsets = [0, 0, 72], sizes = [2, 8, 24], strides = [1, 1, 1]} : vector<2x8x96xf32> to vector<2x8x24xf32>
    %9 = tpu.concatenate %5, %6, %7, %8 in 1 : vector<2x8x24xf32>, vector<2x8x24xf32>, vector<2x8x24xf32>, vector<2x8x24xf32> -> vector<2x32x24xf32>
    %10 = vector.extract_strided_slice %9 {offsets = [0, 0, 0], sizes = [2, 32, 8], strides = [1, 1, 1]} : vector<2x32x24xf32> to vector<2x32x8xf32>
    %11 = vector.extract_strided_slice %9 {offsets = [0, 0, 8], sizes = [2, 32, 8], strides = [1, 1, 1]} : vector<2x32x24xf32> to vector<2x32x8xf32>
    %12 = vector.extract_strided_slice %9 {offsets = [0, 0, 16], sizes = [2, 32, 8], strides = [1, 1, 1]} : vector<2x32x24xf32> to vector<2x32x8xf32>
    "tpu.trace_start"() <{level = 10 : i32, message = "bre,bse->brs"}> : () -> ()
    %cst_4 = arith.constant dense<0.000000e+00> : vector<2x32x32xf32>
    %13 = tpu.matmul %10, %11, %cst_4 {dimension_numbers = #tpu.dot_dimension_numbers<[2], [2], [1], [1], [0, 0, 0, 1, 1, 1], [0], [0]>} : vector<2x32x8xf32>, vector<2x32x8xf32>, vector<2x32x32xf32> -> vector<2x32x32xf32>
    "tpu.trace_stop"() : () -> ()
    %c0_5 = arith.constant 0 : index
    %c0_6 = arith.constant 0 : index
    %14 = vector.load %arg5[%c0_5, %c0_6] : memref<2x8xf32, #tpu.memory_space<vmem>>, vector<2x8xf32>
    %cst_7 = arith.constant 0.000000e+00 : f32
    %15 = vector.broadcast %cst_7 : f32 to vector<2x8xf32>
    %16 = arith.cmpf ogt, %14, %15 : vector<2x8xf32>
    %cst_8 = arith.constant 0.000000e+00 : f32
    %cst_9 = arith.constant -1.000000e+09 : f32
    %17 = vector.broadcast %cst_8 : f32 to vector<2x8xf32>
    %18 = vector.broadcast %cst_9 : f32 to vector<2x8xf32>
    %19 = arith.select %16, %17, %18 : vector<2x8xi1>, vector<2x8xf32>
    %20 = tpu.concatenate %19, %19, %19, %19 in 1 : vector<2x8xf32>, vector<2x8xf32>, vector<2x8xf32>, vector<2x8xf32> -> vector<2x32xf32>
    %c0_10 = arith.constant 0 : index
    %c0_11 = arith.constant 0 : index
    %21 = vector.load %arg4[%c0_10, %c0_11] : memref<32x32xf32, #tpu.memory_space<vmem>>, vector<32x32xf32>
    %22 = vector.shape_cast %21 : vector<32x32xf32> to vector<1x32x32xf32>
    %23 = vector.broadcast %22 : vector<1x32x32xf32> to vector<2x32x32xf32>
    %24 = arith.addf %13, %23 : vector<2x32x32xf32>
    %25 = vector.shape_cast %20 : vector<2x32xf32> to vector<2x1x32xf32>
    %26 = vector.broadcast %25 : vector<2x1x32xf32> to vector<2x32x32xf32>
    %27 = arith.addf %24, %26 : vector<2x32x32xf32>
    %cst_12 = arith.constant dense<0xFF800000> : vector<2x32xf32>
    %28 = vector.multi_reduction <maximumf>, %27, %cst_12 [2] : vector<2x32x32xf32> to vector<2x32xf32>
    %29 = vector.shape_cast %28 : vector<2x32xf32> to vector<2x32x1xf32>
    %30 = vector.broadcast %29 : vector<2x32x1xf32> to vector<2x32x32xf32>
    %31 = arith.subf %27, %30 : vector<2x32x32xf32>
    %32 = math.exp %31 : vector<2x32x32xf32>
    %cst_13 = arith.constant dense<0.000000e+00> : vector<2x32xf32>
    %33 = vector.multi_reduction <add>, %32, %cst_13 [2] : vector<2x32x32xf32> to vector<2x32xf32>
    %34 = vector.shape_cast %33 : vector<2x32xf32> to vector<2x32x1xf32>
    "tpu.trace_start"() <{level = 10 : i32, message = "brs,bse->bre"}> : () -> ()
    %cst_14 = arith.constant dense<0.000000e+00> : vector<2x32x8xf32>
    %35 = tpu.matmul %32, %12, %cst_14 {dimension_numbers = #tpu.dot_dimension_numbers<[2], [1], [1], [2], [0, 0, 0, 1, 1, 2], [0], [0]>} : vector<2x32x32xf32>, vector<2x32x8xf32>, vector<2x32x8xf32> -> vector<2x32x8xf32>
    "tpu.trace_stop"() : () -> ()
    %c0_15 = arith.constant 0 : index
    %c0_16 = arith.constant 0 : index
    %c0_17 = arith.constant 0 : index
    %36 = vector.load %arg3[%c0_15, %c0_16, %c0_17] : memref<1x32x8xf32, #tpu.memory_space<vmem>>, vector<1x32x8xf32>
    %37 = vector.broadcast %36 : vector<1x32x8xf32> to vector<2x32x8xf32>
    %38 = arith.mulf %35, %37 : vector<2x32x8xf32>
    %cst_18 = arith.constant 1.000000e+00 : f32
    %39 = vector.broadcast %cst_18 : f32 to vector<2x32x1xf32>
    %40 = arith.divf %39, %34 : vector<2x32x1xf32>
    %41 = vector.broadcast %40 : vector<2x32x1xf32> to vector<2x32x8xf32>
    %42 = arith.mulf %38, %41 : vector<2x32x8xf32>
    %43 = vector.shape_cast %42 : vector<2x32x8xf32> to vector<2x4x8x8xf32>
    %cst_19 = arith.constant dense<0.000000e+00> : vector<2x8x8xf32>
    %44 = vector.multi_reduction <add>, %43, %cst_19 [1] : vector<2x4x8x8xf32> to vector<2x8x8xf32>
    %cst_20 = arith.constant dense<0.000000e+00> : vector<2x8xf32>
    %45 = vector.multi_reduction <add>, %44, %cst_20 [2] : vector<2x8x8xf32> to vector<2x8xf32>
    %c0_21 = arith.constant 0 : index
    %c0_22 = arith.constant 0 : index
    %46 = vector.load %arg6[%c0_21, %c0_22] : memref<1x8xf32, #tpu.memory_space<vmem>>, vector<1x8xf32>
    %47 = vector.shape_cast %46 : vector<1x8xf32> to vector<1x8xf32>
    %48 = vector.broadcast %47 : vector<1x8xf32> to vector<2x8xf32>
    %49 = arith.select %16, %45, %48 : vector<2x8xi1>, vector<2x8xf32>
    %cst_23 = arith.constant dense<0xFF800000> : vector<2xf32>
    %50 = vector.multi_reduction <maximumf>, %49, %cst_23 [1] : vector<2x8xf32> to vector<2xf32>
    %51 = vector.shape_cast %50 : vector<2xf32> to vector<2x1xf32>
    %52 = vector.broadcast %51 : vector<2x1xf32> to vector<2x8xf32>
    %53 = arith.subf %49, %52 : vector<2x8xf32>
    %54 = math.exp %53 : vector<2x8xf32>
    %cst_24 = arith.constant dense<0.000000e+00> : vector<2xf32>
    %55 = vector.multi_reduction <add>, %54, %cst_24 [1] : vector<2x8xf32> to vector<2xf32>
    %56 = vector.shape_cast %55 : vector<2xf32> to vector<2x1xf32>
    %57 = vector.broadcast %56 : vector<2x1xf32> to vector<2x8xf32>
    %58 = arith.divf %54, %57 : vector<2x8xf32>
    %c0_25 = arith.constant 0 : index
    %c0_26 = arith.constant 0 : index
    %59 = vector.load %arg7[%c0_25, %c0_26] : memref<2x8xf32, #tpu.memory_space<vmem>>, vector<2x8xf32>
    tpu.vector_store %arg7[%c0_25, %c0_26], %58 {strides = array<i32>} : memref<2x8xf32, #tpu.memory_space<vmem>>, vector<2x8xf32>,
    return
  }
  func.func @transform_0(%arg0: i32) -> (i32, i32, i32) {
    %c0_i32 = arith.constant 0 : i32
    %c0_i32_0 = arith.constant 0 : i32
    %c0_i32_1 = arith.constant 0 : i32
    return %arg0, %c0_i32, %c0_i32_0 : i32, i32, i32
  }
  func.func @transform_1(%arg0: i32) -> (i32, i32) {
    %c0_i32 = arith.constant 0 : i32
    %c0_i32_0 = arith.constant 0 : i32
    %c0_i32_1 = arith.constant 0 : i32
    return %c0_i32, %c0_i32_0 : i32, i32
  }
  func.func @transform_2(%arg0: i32) -> (i32, i32, i32) {
    %c0_i32 = arith.constant 0 : i32
    %c0_i32_0 = arith.constant 0 : i32
    %c0_i32_1 = arith.constant 0 : i32
    %c0_i32_2 = arith.constant 0 : i32
    return %c0_i32, %c0_i32_0, %c0_i32_1 : i32, i32, i32
  }
  func.func @transform_3(%arg0: i32) -> (i32, i32) {
    %c0_i32 = arith.constant 0 : i32
    %c0_i32_0 = arith.constant 0 : i32
    %c0_i32_1 = arith.constant 0 : i32
    return %c0_i32, %c0_i32_0 : i32, i32
  }
  func.func @transform_4(%arg0: i32) -> (i32, i32) {
    %c0_i32 = arith.constant 0 : i32
    %c0_i32_0 = arith.constant 0 : i32
    return %arg0, %c0_i32 : i32, i32
  }
  func.func @transform_5(%arg0: i32) -> (i32, i32) {
    %c0_i32 = arith.constant 0 : i32
    %c0_i32_0 = arith.constant 0 : i32
    %c0_i32_1 = arith.constant 0 : i32
    return %c0_i32, %c0_i32_0 : i32, i32
  }
  func.func @transform_6(%arg0: i32) -> (i32, i32) {
    %c0_i32 = arith.constant 0 : i32
    %c0_i32_0 = arith.constant 0 : i32
    return %arg0, %c0_i32 : i32, i32
  }
}

</mosaic_0001>

<llo_original>
// kernel: tpu_custom_call.1
$region0: #{tpu_custom_call.1}
  #allocation0 [shape = 'u32[]', space=smem, size = 0x4, offset = 0x4, fixed_abs, tag = 'smem constant byte address 0x4 - core index']
  #allocation1 [shape = 'u32[144,128]{1,0:T(1,128)}', space=vmem, size = 0x12000, scoped, tag = 'internal scratch']
  %s0 = inlined_call_operand.vmem [shape: f32[2,8,16], index: 0, kind: input, shape index: {}]
  %s1 = inlined_call_operand.hbm [shape: f32[16,96], index: 1, kind: input, shape index: {}]
  %s2 = inlined_call_operand.vmem [shape: f32[1,32,8], index: 2, kind: input, shape index: {}]
  %s3 = inlined_call_operand.vmem [shape: f32[32,32], index: 3, kind: input, shape index: {}]
  %s4 = inlined_call_operand.vmem [shape: f32[2,8], index: 4, kind: input, shape index: {}]
  %s5 = inlined_call_operand.vmem [shape: f32[1,8], index: 5, kind: input, shape index: {}]
  %s6 = inlined_call_operand.hbm [shape: f32[2,8], index: 6, kind: output, shape index: {}]
  %s7 = sld [smem:[#allocation0]]
  $region38: #{tpu_custom_call.1} parent=0
    _
  %s9 = ssub.s32 1, %s7
  %s10 = scalar_select 0, %s9, %s7
  $region1: #{tpu_custom_call.1} parent=0
    #allocation2 [shape = 'u8[8192]{0}', space=vmem, size = 0x2000, scoped, tag = 'input window, operand 1, single buffered']
    #allocation3 [shape = 's32[1]{0}', space=sflag, size = 0x4, scoped, tag = 'scoped memory for tpu_custom_call.1']
    #allocation4 [shape = 's32[1]{0}', space=sflag, size = 0x4, scoped, tag = 'scoped memory for tpu_custom_call.1']
    #allocation5 [shape = 'u8[1024]{0}', space=vmem, size = 0x400, scoped, tag = 'output window, operand 0, single buffered']
    %11 = vsyncpa [#allocation3], 0
    %12 = vsyncpa [#allocation4], 0
    // Predicated region
    $region2: #{tpu_custom_call.1} parent=1 // pred_check
      _
    $region3: #{tpu_custom_call.1} parent=1 // pred_check_branch
      %14 = sbr.rel (0) target = $region5
    $region4: #{tpu_custom_call.1} parent=1 // pred_region
      _
    $region5: #{tpu_custom_call.1} parent=1 // pred_fallthru
      _
    // Predicated region
    $region6: #{tpu_custom_call.1} parent=1 // pred_check
      _
    $region7: #{tpu_custom_call.1} parent=1 // pred_check_branch
      %16 = sbr.rel (0) target = $region9
    $region8: #{tpu_custom_call.1} parent=1 // pred_region
      %s18 = ssub.s32 256, 256
      %19 = vsyncadd [#allocation3], %s18
      %s20 = sshll.u32 [#allocation2], 4
      %s21 = int_to_ptr.vmem [resolvable:$true] %s20
      %26 = dma.hbm_to_vmem [thread:$0]  %s1, 256, %s21, [#allocation3], 128, 128, 8
    $region9: #{tpu_custom_call.1} parent=1 // pred_fallthru
      _
    // Predicated region
    $region10: #{tpu_custom_call.1} parent=1 // pred_check
      _
    $region11: #{tpu_custom_call.1} parent=1 // pred_check_branch
      %28 = sbr.rel (0) target = $region13
    $region12: #{tpu_custom_call.1} parent=1 // pred_region
      _
    $region13: #{tpu_custom_call.1} parent=1 // pred_fallthru
      _
    // Predicated region
    $region14: #{tpu_custom_call.1} parent=1 // pred_check
      _
    $region15: #{tpu_custom_call.1} parent=1 // pred_check_branch
      %30 = sbr.rel (0) target = $region17
    $region16: #{tpu_custom_call.1} parent=1 // pred_region
      _
    $region17: #{tpu_custom_call.1} parent=1 // pred_fallthru
      _
    // Predicated region
    $region18: #{tpu_custom_call.1} parent=1 // pred_check
      _
    $region19: #{tpu_custom_call.1} parent=1 // pred_check_branch
      %32 = sbr.rel (0) target = $region21
    $region20: #{tpu_custom_call.1} parent=1 // pred_region
      _
    $region21: #{tpu_custom_call.1} parent=1 // pred_fallthru
      _
    // Predicated region
    $region22: #{tpu_custom_call.1} parent=1 // pred_check
      _
    $region23: #{tpu_custom_call.1} parent=1 // pred_check_branch
      %34 = sbr.rel (0) target = $region25
    $region24: #{tpu_custom_call.1} parent=1 // pred_region
      _
    $region25: #{tpu_custom_call.1} parent=1 // pred_fallthru
      _
    // Predicated region
    $region26: #{tpu_custom_call.1} parent=1 // pred_check
      _
    $region27: #{tpu_custom_call.1} parent=1 // pred_check_branch
      %36 = sbr.rel (0) target = $region29
    $region28: #{tpu_custom_call.1} parent=1 // pred_region
      %37 = dma.done [#allocation3], 256
    $region29: #{tpu_custom_call.1} parent=1 // pred_fallthru
      _
    %v38 = vld [vmem:[%s0] sm:$0xff]
    %v39 = vld [vmem:[%s0 + $0x8] sm:$0xff]
    %v40 = vld [vmem:[#allocation2] sm:$0xff]
    %v41 = vld [vmem:[#allocation2 + $0x8] sm:$0xff]
    %vm42 = vcmask 130048
    %v44 = vsel %vm42, %v38, 0
    %v47 = vsel %vm42, %v39, 0
    %49 = vmatprep.subr.mxu0 0.0
    %50 = vmatpush1.msra.mxu0 %v40
    %51 = vmatprep.subr.mxu0 0.0
    %52 = vmatpush1.msra.mxu0 %v41
    %53 = vmatprep.subr.mxu0 0.0
    %54 = vmatpush1.msra.mxu0 0.0
    %55 = vmatprep.subr.mxu0 0.0
    %56 = vmatpush1.msra.mxu0 0.0
    %57 = vmatprep.subr.mxu0 0.0
    %58 = vmatpush1.msra.mxu0 0.0
    %59 = vmatprep.subr.mxu0 0.0
    %60 = vmatpush1.msra.mxu0 0.0
    %61 = vmatprep.subr.mxu0 0.0
    %62 = vmatpush1.msra.mxu0 0.0
    %63 = vmatprep.subr.mxu0 0.0
    %64 = vmatpush1.msra.mxu0 0.0
    %65 = vmatprep.subr.mxu0 0.0
    %66 = vmatpush1.msra.mxu0 0.0
    %67 = vmatprep.subr.mxu0 0.0
    %68 = vmatpush1.msra.mxu0 0.0
    %69 = vmatprep.subr.mxu0 0.0
    %70 = vmatpush1.msra.mxu0 0.0
    %71 = vmatprep.subr.mxu0 0.0
    %72 = vmatpush1.msra.mxu0 0.0
    %73 = vmatprep.subr.mxu0 0.0
    %74 = vmatpush1.msra.mxu0 0.0
    %75 = vmatprep.subr.mxu0 0.0
    %76 = vmatpush1.msra.mxu0 0.0
    %77 = vmatprep.subr.mxu0 0.0
    %78 = vmatpush1.msra.mxu0 0.0
    %79 = vmatprep.subr.mxu0 0.0
    %80 = vmatpush1.msra.mxu0 0.0
    %81 = vmatprep.subr.mxu0 0.0
    %82 = vmatpush1.msra.mxu0 0.0
    %83 = vmatprep.subr.mxu0 0.0
    %84 = vmatpush1.msra.mxu0 0.0
    %85 = vmatprep.subr.mxu0 0.0
    %86 = vmatpush1.msra.mxu0 0.0
    %87 = vmatprep.subr.mxu0 0.0
    %88 = vmatpush1.msra.mxu0 0.0
    %89 = vmatprep.subr.mxu0 0.0
    %90 = vmatpush1.msra.mxu0 0.0
    %91 = vmatprep.subr.mxu0 0.0
    %92 = vmatpush1.msra.mxu0 0.0
    %93 = vmatprep.subr.mxu0 0.0
    %94 = vmatpush1.msra.mxu0 0.0
    %95 = vmatprep.subr.mxu0 0.0
    %96 = vmatpush1.msra.mxu0 0.0
    %97 = vmatprep.subr.mxu0 0.0
    %98 = vmatpush1.msra.mxu0 0.0
    %99 = vmatprep.subr.mxu0 0.0
    %100 = vmatpush1.msra.mxu0 0.0
    %101 = vmatprep.subr.mxu0 0.0
    %102 = vmatpush1.msra.mxu0 0.0
    %103 = vmatprep.subr.mxu0 0.0
    %104 = vmatpush1.msra.mxu0 0.0
    %105 = vmatprep.subr.mxu0 0.0
    %106 = vmatpush1.msra.mxu0 0.0
    %107 = vmatprep.subr.mxu0 0.0
    %108 = vmatpush1.msra.mxu0 0.0
    %109 = vmatprep.subr.mxu0 0.0
    %110 = vmatpush1.msra.mxu0 0.0
    %111 = vmatprep.subr.mxu0 0.0
    %112 = vmatpush1.msra.mxu0 0.0
    %113 = vmatprep.mubr.f32.mxu0 0.0
    %114 = vmatmul.mubr.f32.gmra.mrb[0].mxu0 %v44
    %v115 = vpop.f32.mrb[0].mxu0
    %v116 = vadd.f32 0.0, %v115
    %v117 = vpop.f32.mrb[0].mxu0
    %118 = vmatprep.mubr.f32.mxu0 0.0
    %119 = vmatmul.mubr.f32.gmra.mrb[0].mxu0 %v47
    %v120 = vpop.f32.mrb[0].mxu0
    %v121 = vadd.f32 0.0, %v120
    %v122 = vpop.f32.mrb[0].mxu0
    %123 = vdwg.mxu0
    %126 = vrot.lane.b32.xlu0 %v116, 104
    %v127 = vpop.permute.xlu0 %126
    %128 = vrot.lane.b32.xlu0 %v121, 104
    %v129 = vpop.permute.xlu0 %128
    %130 = vrot.lane.b32.xlu0 %v116, 80
    %v131 = vpop.permute.xlu0 %130
    %132 = vrot.lane.b32.xlu0 %v121, 80
    %v133 = vpop.permute.xlu0 %132
    %134 = vrot.lane.b32.xlu0 %v116, 56
    %v135 = vpop.permute.xlu0 %134
    %136 = vrot.lane.b32.xlu0 %v121, 56
    %v137 = vpop.permute.xlu0 %136
    %v138 = vld [vmem:[%s4] sm:$0x3]
    %vm139 = vcmp.gt.f32.partialorder %v138, 0.0
    %v140 = vsel %vm139, 0.0, -1e+09
    %142 = vrot.lane.b32.xlu0 %v140, 8
    %v143 = vpop.permute.xlu0 %142
    %145 = vrot.lane.b32.xlu0 %v140, 16
    %v146 = vpop.permute.xlu0 %145
    %148 = vrot.lane.b32.xlu0 %v140, 24
    %v149 = vpop.permute.xlu0 %148
    %vm151 = vcmask 64512
    %v152 = vsel %vm151, %v140, %v143
    %v153 = vsel %vm42, %v152, %v146
    %vm154 = vcmask 195584
    %v155 = vsel %vm154, %v153, %v149
    %v156 = vld [vmem:[%s3] sm:$0xff]
    %v157 = vld [vmem:[%s3 + $0x8] sm:$0xff]
    %v158 = vld [vmem:[%s3 + $0x10] sm:$0xff]
    %v159 = vld [vmem:[%s3 + $0x18] sm:$0xff]
    %160 = vrot.lane.b32.xlu0 %v116, 120
    %v161 = vpop.permute.xlu0 %160
    %162 = vrot.lane.b32.xlu0 %v127, 120
    %v163 = vpop.permute.xlu0 %162
    %164 = vrot.lane.b32.xlu0 %v131, 120
    %v165 = vpop.permute.xlu0 %164
    %166 = vrot.lane.b32.xlu0 %v135, 120
    %v167 = vpop.permute.xlu0 %166
    %v168 = vsel %vm151, %v116, 0
    %v170 = vsel %vm151, %v127, 0
    %v172 = vsel %vm151, %v131, 0
    %v174 = vsel %vm151, %v135, 0
    %v176 = vsel %vm151, %v161, 0
    %v178 = vsel %vm151, %v163, 0
    %v180 = vsel %vm151, %v165, 0
    %v182 = vsel %vm151, %v167, 0
    %184 = vmatprep.subr.mxu0 0.0
    %185 = vmatpush1.xpose.msra.mxu0 %v176
    %186 = vmatprep.subr.mxu0 0.0
    %187 = vmatpush1.xpose.msra.mxu0 %v178
    %188 = vmatprep.subr.mxu0 0.0
    %189 = vmatpush1.xpose.msra.mxu0 %v180
    %190 = vmatprep.subr.mxu0 0.0
    %191 = vmatpush1.xpose.msra.mxu0 %v182
    %192 = vmatprep.subr.mxu0 0.0
    %193 = vmatpush1.xpose.msra.mxu0 0.0
    %194 = vmatprep.subr.mxu0 0.0
    %195 = vmatpush1.xpose.msra.mxu0 0.0
    %196 = vmatprep.subr.mxu0 0.0
    %197 = vmatpush1.xpose.msra.mxu0 0.0
    %198 = vmatprep.subr.mxu0 0.0
    %199 = vmatpush1.xpose.msra.mxu0 0.0
    %200 = vmatprep.subr.mxu0 0.0
    %201 = vmatpush1.xpose.msra.mxu0 0.0
    %202 = vmatprep.subr.mxu0 0.0
    %203 = vmatpush1.xpose.msra.mxu0 0.0
    %204 = vmatprep.subr.mxu0 0.0
    %205 = vmatpush1.xpose.msra.mxu0 0.0
    %206 = vmatprep.subr.mxu0 0.0
    %207 = vmatpush1.xpose.msra.mxu0 0.0
    %208 = vmatprep.subr.mxu0 0.0
    %209 = vmatpush1.xpose.msra.mxu0 0.0
    %210 = vmatprep.subr.mxu0 0.0
    %211 = vmatpush1.xpose.msra.mxu0 0.0
    %212 = vmatprep.subr.mxu0 0.0
    %213 = vmatpush1.xpose.msra.mxu0 0.0
    %214 = vmatprep.subr.mxu0 0.0
    %215 = vmatpush1.xpose.msra.mxu0 0.0
    %216 = vmatprep.subr.mxu0 0.0
    %217 = vmatpush1.xpose.msra.mxu0 0.0
    %218 = vmatprep.subr.mxu0 0.0
    %219 = vmatpush1.xpose.msra.mxu0 0.0
    %220 = vmatprep.subr.mxu0 0.0
    %221 = vmatpush1.xpose.msra.mxu0 0.0
    %222 = vmatprep.subr.mxu0 0.0
    %223 = vmatpush1.xpose.msra.mxu0 0.0
    %224 = vmatprep.subr.mxu0 0.0
    %225 = vmatpush1.xpose.msra.mxu0 0.0
    %226 = vmatprep.subr.mxu0 0.0
    %227 = vmatpush1.xpose.msra.mxu0 0.0
    %228 = vmatprep.subr.mxu0 0.0
    %229 = vmatpush1.xpose.msra.mxu0 0.0
    %230 = vmatprep.subr.mxu0 0.0
    %231 = vmatpush1.xpose.msra.mxu0 0.0
    %232 = vmatprep.subr.mxu0 0.0
    %233 = vmatpush1.xpose.msra.mxu0 0.0
    %234 = vmatprep.subr.mxu0 0.0
    %235 = vmatpush1.xpose.msra.mxu0 0.0
    %236 = vmatprep.subr.mxu0 0.0
    %237 = vmatpush1.xpose.msra.mxu0 0.0
    %238 = vmatprep.subr.mxu0 0.0
    %239 = vmatpush1.xpose.msra.mxu0 0.0
    %240 = vmatprep.subr.mxu0 0.0
    %241 = vmatpush1.xpose.msra.mxu0 0.0
    %242 = vmatprep.subr.mxu0 0.0
    %243 = vmatpush1.xpose.msra.mxu0 0.0
    %244 = vmatprep.subr.mxu0 0.0
    %245 = vmatpush1.xpose.msra.mxu0 0.0
    %246 = vmatprep.subr.mxu0 0.0
    %247 = vmatpush1.xpose.msra.mxu0 0.0
    %248 = vmatprep.mubr.f32.mxu0 0.0
    %249 = vmatmul.mubr.f32.gmra.mrb[0].mxu0 %v168
    %v250 = vpop.f32.mrb[0].mxu0
    %v251 = vadd.f32 %v156, %v250
    %v252 = vpop.f32.mrb[0].mxu0
    %253 = vmatprep.mubr.f32.mxu0 0.0
    %254 = vmatmul.mubr.f32.gmra.mrb[0].mxu0 %v170
    %v255 = vpop.f32.mrb[0].mxu0
    %v256 = vadd.f32 %v157, %v255
    %v257 = vpop.f32.mrb[0].mxu0
    %258 = vmatprep.mubr.f32.mxu0 0.0
    %259 = vmatmul.mubr.f32.gmra.mrb[0].mxu0 %v172
    %v260 = vpop.f32.mrb[0].mxu0
    %v261 = vadd.f32 %v158, %v260
    %v262 = vpop.f32.mrb[0].mxu0
    %263 = vmatprep.mubr.f32.mxu0 0.0
    %264 = vmatmul.mubr.f32.gmra.mrb[0].mxu0 %v174
    %v265 = vpop.f32.mrb[0].mxu0
    %v266 = vadd.f32 %v159, %v265
    %v267 = vpop.f32.mrb[0].mxu0
    %268 = vdwg.mxu0
    %269 = vrot.lane.b32.xlu0 %v121, 120
    %v270 = vpop.permute.xlu0 %269
    %271 = vrot.lane.b32.xlu0 %v129, 120
    %v272 = vpop.permute.xlu0 %271
    %273 = vrot.lane.b32.xlu0 %v133, 120
    %v274 = vpop.permute.xlu0 %273
    %275 = vrot.lane.b32.xlu0 %v137, 120
    %v276 = vpop.permute.xlu0 %275
    %v277 = vsel %vm151, %v121, 0
    %v279 = vsel %vm151, %v129, 0
    %v281 = vsel %vm151, %v133, 0
    %v283 = vsel %vm151, %v137, 0
    %v285 = vsel %vm151, %v270, 0
    %v287 = vsel %vm151, %v272, 0
    %v289 = vsel %vm151, %v274, 0
    %v291 = vsel %vm151, %v276, 0
    %293 = vmatprep.subr.mxu0 0.0
    %294 = vmatpush1.xpose.msra.mxu0 %v285
    %295 = vmatprep.subr.mxu0 0.0
    %296 = vmatpush1.xpose.msra.mxu0 %v287
    %297 = vmatprep.subr.mxu0 0.0
    %298 = vmatpush1.xpose.msra.mxu0 %v289
    %299 = vmatprep.subr.mxu0 0.0
    %300 = vmatpush1.xpose.msra.mxu0 %v291
    %301 = vmatprep.subr.mxu0 0.0
    %302 = vmatpush1.xpose.msra.mxu0 0.0
    %303 = vmatprep.subr.mxu0 0.0
    %304 = vmatpush1.xpose.msra.mxu0 0.0
    %305 = vmatprep.subr.mxu0 0.0
    %306 = vmatpush1.xpose.msra.mxu0 0.0
    %307 = vmatprep.subr.mxu0 0.0
    %308 = vmatpush1.xpose.msra.mxu0 0.0
    %309 = vmatprep.subr.mxu0 0.0
    %310 = vmatpush1.xpose.msra.mxu0 0.0
    %311 = vmatprep.subr.mxu0 0.0
    %312 = vmatpush1.xpose.msra.mxu0 0.0
    %313 = vmatprep.subr.mxu0 0.0
    %314 = vmatpush1.xpose.msra.mxu0 0.0
    %315 = vmatprep.subr.mxu0 0.0
    %316 = vmatpush1.xpose.msra.mxu0 0.0
    %317 = vmatprep.subr.mxu0 0.0
    %318 = vmatpush1.xpose.msra.mxu0 0.0
    %319 = vmatprep.subr.mxu0 0.0
    %320 = vmatpush1.xpose.msra.mxu0 0.0
    %321 = vmatprep.subr.mxu0 0.0
    %322 = vmatpush1.xpose.msra.mxu0 0.0
    %323 = vmatprep.subr.mxu0 0.0
    %324 = vmatpush1.xpose.msra.mxu0 0.0
    %325 = vmatprep.subr.mxu0 0.0
    %326 = vmatpush1.xpose.msra.mxu0 0.0
    %327 = vmatprep.subr.mxu0 0.0
    %328 = vmatpush1.xpose.msra.mxu0 0.0
    %329 = vmatprep.subr.mxu0 0.0
    %330 = vmatpush1.xpose.msra.mxu0 0.0
    %331 = vmatprep.subr.mxu0 0.0
    %332 = vmatpush1.xpose.msra.mxu0 0.0
    %333 = vmatprep.subr.mxu0 0.0
    %334 = vmatpush1.xpose.msra.mxu0 0.0
    %335 = vmatprep.subr.mxu0 0.0
    %336 = vmatpush1.xpose.msra.mxu0 0.0
    %337 = vmatprep.subr.mxu0 0.0
    %338 = vmatpush1.xpose.msra.mxu0 0.0
    %339 = vmatprep.subr.mxu0 0.0
    %340 = vmatpush1.xpose.msra.mxu0 0.0
    %341 = vmatprep.subr.mxu0 0.0
    %342 = vmatpush1.xpose.msra.mxu0 0.0
    %343 = vmatprep.subr.mxu0 0.0
    %344 = vmatpush1.xpose.msra.mxu0 0.0
    %345 = vmatprep.subr.mxu0 0.0
    %346 = vmatpush1.xpose.msra.mxu0 0.0
    %347 = vmatprep.subr.mxu0 0.0
    %348 = vmatpush1.xpose.msra.mxu0 0.0
    %349 = vmatprep.subr.mxu0 0.0
    %350 = vmatpush1.xpose.msra.mxu0 0.0
    %351 = vmatprep.subr.mxu0 0.0
    %352 = vmatpush1.xpose.msra.mxu0 0.0
    %353 = vmatprep.subr.mxu0 0.0
    %354 = vmatpush1.xpose.msra.mxu0 0.0
    %355 = vmatprep.subr.mxu0 0.0
    %356 = vmatpush1.xpose.msra.mxu0 0.0
    %357 = vmatprep.mubr.f32.mxu0 0.0
    %358 = vmatmul.mubr.f32.gmra.mrb[0].mxu0 %v277
    %v359 = vpop.f32.mrb[0].mxu0
    %v360 = vadd.f32 %v156, %v359
    %v361 = vpop.f32.mrb[0].mxu0
    %362 = vmatprep.mubr.f32.mxu0 0.0
    %363 = vmatmul.mubr.f32.gmra.mrb[0].mxu0 %v279
    %v364 = vpop.f32.mrb[0].mxu0
    %v365 = vadd.f32 %v157, %v364
    %v366 = vpop.f32.mrb[0].mxu0
    %367 = vmatprep.mubr.f32.mxu0 0.0
    %368 = vmatmul.mubr.f32.gmra.mrb[0].mxu0 %v281
    %v369 = vpop.f32.mrb[0].mxu0
    %v370 = vadd.f32 %v158, %v369
    %v371 = vpop.f32.mrb[0].mxu0
    %372 = vmatprep.mubr.f32.mxu0 0.0
    %373 = vmatmul.mubr.f32.gmra.mrb[0].mxu0 %v283
    %v374 = vpop.f32.mrb[0].mxu0
    %v375 = vadd.f32 %v159, %v374
    %v376 = vpop.f32.mrb[0].mxu0
    %377 = vdwg.mxu0
    %v380 = vunpack.c.l.s4 1966171168
    %v381 = vunpack.c.0.s8 %v380
    %v382 = vlaneseq
    %v383 = vshrl.u32 %v382, 7
    %v384 = vsub.s32 %v381, %v383
    %v385 = vrot.slane %v155, %v384
    %v386 = vcombine.high %v385, %v385
    %v388 = vunpack.c.l.s4 1966171168
    %v389 = vunpack.c.0.s8 %v388
    %v390 = vlaneseq
    %v391 = vshrl.u32 %v390, 7
    %v392 = vsub.s32 %v389, %v391
    %v393 = vrot.slane %v385, %v392
    %v395 = vunpack.c.l.s4 1966171168
    %v396 = vunpack.c.0.s8 %v395
    %v397 = vlaneseq
    %v398 = vshrl.u32 %v397, 7
    %v399 = vsub.s32 %v396, %v398
    %v400 = vrot.slane %v386, %v399
    %v401 = vlaneseq
    %v402 = vshrl.u32 %v401, 7
    %v403 = vsub.s32 0, %v402
    %v404 = vrot.slane %v393, %v403
    %v405 = vlaneseq
    %v406 = vshrl.u32 %v405, 7
    %v407 = vsub.s32 0, %v406
    %v408 = vrot.slane %v400, %v407
    %v411 = vadd.f32 %v251, %v404
    %v412 = vadd.f32 %v256, %v404
    %v413 = vadd.f32 %v261, %v404
    %v414 = vadd.f32 %v266, %v404
    %v415 = vadd.f32 %v360, %v408
    %v416 = vadd.f32 %v365, %v408
    %v417 = vadd.f32 %v370, %v408
    %v418 = vadd.f32 %v375, %v408
    %vm419 = vcmask 261120
    %v420 = vsel %vm419, %v411, -inf
    %421 = vmax.xlane.f32.xlu0 %v420
    %v422 = vpop.xlane.xlu0 %421
    %v423 = vsel %vm419, %v412, -inf
    %424 = vmax.xlane.f32.xlu0 %v423
    %v425 = vpop.xlane.xlu0 %424
    %v426 = vsel %vm419, %v413, -inf
    %427 = vmax.xlane.f32.xlu0 %v426
    %v428 = vpop.xlane.xlu0 %427
    %v429 = vsel %vm419, %v414, -inf
    %430 = vmax.xlane.f32.xlu0 %v429
    %v431 = vpop.xlane.xlu0 %430
    %v432 = vsel %vm419, %v415, -inf
    %433 = vmax.xlane.f32.xlu0 %v432
    %v434 = vpop.xlane.xlu0 %433
    %v435 = vsel %vm419, %v416, -inf
    %436 = vmax.xlane.f32.xlu0 %v435
    %v437 = vpop.xlane.xlu0 %436
    %v438 = vsel %vm419, %v417, -inf
    %439 = vmax.xlane.f32.xlu0 %v438
    %v440 = vpop.xlane.xlu0 %439
    %v441 = vsel %vm419, %v418, -inf
    %442 = vmax.xlane.f32.xlu0 %v441
    %v443 = vpop.xlane.xlu0 %442
    %v444 = vsub.f32 %v411, %v422
    %v445 = vsub.f32 %v412, %v425
    %v446 = vsub.f32 %v413, %v428
    %v447 = vsub.f32 %v414, %v431
    %v448 = vsub.f32 %v415, %v434
    %v449 = vsub.f32 %v416, %v437
    %v450 = vsub.f32 %v417, %v440
    %v451 = vsub.f32 %v418, %v443
    %v452 = vmul.f32 %v444, 1.442695
    %v453 = vpow.pop %v452
    %v454 = vmul.f32 %v445, 1.442695
    %v455 = vpow.pop %v454
    %v456 = vmul.f32 %v446, 1.442695
    %v457 = vpow.pop %v456
    %v458 = vmul.f32 %v447, 1.442695
    %v459 = vpow.pop %v458
    %v460 = vmul.f32 %v448, 1.442695
    %v461 = vpow.pop %v460
    %v462 = vmul.f32 %v449, 1.442695
    %v463 = vpow.pop %v462
    %v464 = vmul.f32 %v450, 1.442695
    %v465 = vpow.pop %v464
    %v466 = vmul.f32 %v451, 1.442695
    %v467 = vpow.pop %v466
    %v468 = vsel %vm419, %v453, 0.0
    %469 = vadd.xlane.f32.xlu0 %v468
    %v470 = vpop.xlane.xlu0 %469
    %v471 = vsel %vm419, %v455, 0.0
    %472 = vadd.xlane.f32.xlu0 %v471
    %v473 = vpop.xlane.xlu0 %472
    %v474 = vsel %vm419, %v457, 0.0
    %475 = vadd.xlane.f32.xlu0 %v474
    %v476 = vpop.xlane.xlu0 %475
    %v477 = vsel %vm419, %v459, 0.0
    %478 = vadd.xlane.f32.xlu0 %v477
    %v479 = vpop.xlane.xlu0 %478
    %v480 = vsel %vm419, %v461, 0.0
    %481 = vadd.xlane.f32.xlu0 %v480
    %v482 = vpop.xlane.xlu0 %481
    %v483 = vsel %vm419, %v463, 0.0
    %484 = vadd.xlane.f32.xlu0 %v483
    %v485 = vpop.xlane.xlu0 %484
    %v486 = vsel %vm419, %v465, 0.0
    %487 = vadd.xlane.f32.xlu0 %v486
    %v488 = vpop.xlane.xlu0 %487
    %v489 = vsel %vm419, %v467, 0.0
    %490 = vadd.xlane.f32.xlu0 %v489
    %v491 = vpop.xlane.xlu0 %490
    %492 = vrot.lane.b32.xlu0 %v116, 112
    %v493 = vpop.permute.xlu0 %492
    %494 = vrot.lane.b32.xlu0 %v127, 112
    %v495 = vpop.permute.xlu0 %494
    %496 = vrot.lane.b32.xlu0 %v131, 112
    %v497 = vpop.permute.xlu0 %496
    %498 = vrot.lane.b32.xlu0 %v135, 112
    %v499 = vpop.permute.xlu0 %498
    %v505 = vsel %vm419, %v453, 0
    %v508 = vsel %vm419, %v455, 0
    %v511 = vsel %vm419, %v457, 0
    %v514 = vsel %vm419, %v459, 0
    %516 = vmatprep.subr.mxu0 0.0
    %517 = vmatpush1.msra.mxu0 %v493
    %518 = vmatprep.subr.mxu0 0.0
    %519 = vmatpush1.msra.mxu0 %v495
    %520 = vmatprep.subr.mxu0 0.0
    %521 = vmatpush1.msra.mxu0 %v497
    %522 = vmatprep.subr.mxu0 0.0
    %523 = vmatpush1.msra.mxu0 %v499
    %524 = vmatprep.subr.mxu0 0.0
    %525 = vmatpush1.msra.mxu0 0.0
    %526 = vmatprep.subr.mxu0 0.0
    %527 = vmatpush1.msra.mxu0 0.0
    %528 = vmatprep.subr.mxu0 0.0
    %529 = vmatpush1.msra.mxu0 0.0
    %530 = vmatprep.subr.mxu0 0.0
    %531 = vmatpush1.msra.mxu0 0.0
    %532 = vmatprep.subr.mxu0 0.0
    %533 = vmatpush1.msra.mxu0 0.0
    %534 = vmatprep.subr.mxu0 0.0
    %535 = vmatpush1.msra.mxu0 0.0
    %536 = vmatprep.subr.mxu0 0.0
    %537 = vmatpush1.msra.mxu0 0.0
    %538 = vmatprep.subr.mxu0 0.0
    %539 = vmatpush1.msra.mxu0 0.0
    %540 = vmatprep.subr.mxu0 0.0
    %541 = vmatpush1.msra.mxu0 0.0
    %542 = vmatprep.subr.mxu0 0.0
    %543 = vmatpush1.msra.mxu0 0.0
    %544 = vmatprep.subr.mxu0 0.0
    %545 = vmatpush1.msra.mxu0 0.0
    %546 = vmatprep.subr.mxu0 0.0
    %547 = vmatpush1.msra.mxu0 0.0
    %548 = vmatprep.subr.mxu0 0.0
    %549 = vmatpush1.msra.mxu0 0.0
    %550 = vmatprep.subr.mxu0 0.0
    %551 = vmatpush1.msra.mxu0 0.0
    %552 = vmatprep.subr.mxu0 0.0
    %553 = vmatpush1.msra.mxu0 0.0
    %554 = vmatprep.subr.mxu0 0.0
    %555 = vmatpush1.msra.mxu0 0.0
    %556 = vmatprep.subr.mxu0 0.0
    %557 = vmatpush1.msra.mxu0 0.0
    %558 = vmatprep.subr.mxu0 0.0
    %559 = vmatpush1.msra.mxu0 0.0
    %560 = vmatprep.subr.mxu0 0.0
    %561 = vmatpush1.msra.mxu0 0.0
    %562 = vmatprep.subr.mxu0 0.0
    %563 = vmatpush1.msra.mxu0 0.0
    %564 = vmatprep.subr.mxu0 0.0
    %565 = vmatpush1.msra.mxu0 0.0
    %566 = vmatprep.subr.mxu0 0.0
    %567 = vmatpush1.msra.mxu0 0.0
    %568 = vmatprep.subr.mxu0 0.0
    %569 = vmatpush1.msra.mxu0 0.0
    %570 = vmatprep.subr.mxu0 0.0
    %571 = vmatpush1.msra.mxu0 0.0
    %572 = vmatprep.subr.mxu0 0.0
    %573 = vmatpush1.msra.mxu0 0.0
    %574 = vmatprep.subr.mxu0 0.0
    %575 = vmatpush1.msra.mxu0 0.0
    %576 = vmatprep.subr.mxu0 0.0
    %577 = vmatpush1.msra.mxu0 0.0
    %578 = vmatprep.subr.mxu0 0.0
    %579 = vmatpush1.msra.mxu0 0.0
    %580 = vmatprep.mubr.f32.mxu0 0.0
    %581 = vmatmul.mubr.f32.gmra.mrb[0].mxu0 %v505
    %v582 = vpop.f32.mrb[0].mxu0
    %v583 = vadd.f32 0.0, %v582
    %v584 = vpop.f32.mrb[0].mxu0
    %585 = vmatprep.mubr.f32.mxu0 0.0
    %586 = vmatmul.mubr.f32.gmra.mrb[0].mxu0 %v508
    %v587 = vpop.f32.mrb[0].mxu0
    %v588 = vadd.f32 0.0, %v587
    %v589 = vpop.f32.mrb[0].mxu0
    %590 = vmatprep.mubr.f32.mxu0 0.0
    %591 = vmatmul.mubr.f32.gmra.mrb[0].mxu0 %v511
    %v592 = vpop.f32.mrb[0].mxu0
    %v593 = vadd.f32 0.0, %v592
    %v594 = vpop.f32.mrb[0].mxu0
    %595 = vmatprep.mubr.f32.mxu0 0.0
    %596 = vmatmul.mubr.f32.gmra.mrb[0].mxu0 %v514
    %v597 = vpop.f32.mrb[0].mxu0
    %v598 = vadd.f32 0.0, %v597
    %v599 = vpop.f32.mrb[0].mxu0
    %600 = vdwg.mxu0
    %601 = vrot.lane.b32.xlu0 %v121, 112
    %v602 = vpop.permute.xlu0 %601
    %603 = vrot.lane.b32.xlu0 %v129, 112
    %v604 = vpop.permute.xlu0 %603
    %605 = vrot.lane.b32.xlu0 %v133, 112
    %v606 = vpop.permute.xlu0 %605
    %607 = vrot.lane.b32.xlu0 %v137, 112
    %v608 = vpop.permute.xlu0 %607
    %v614 = vsel %vm419, %v461, 0
    %v617 = vsel %vm419, %v463, 0
    %v620 = vsel %vm419, %v465, 0
    %v623 = vsel %vm419, %v467, 0
    %625 = vmatprep.subr.mxu0 0.0
    %626 = vmatpush1.msra.mxu0 %v602
    %627 = vmatprep.subr.mxu0 0.0
    %628 = vmatpush1.msra.mxu0 %v604
    %629 = vmatprep.subr.mxu0 0.0
    %630 = vmatpush1.msra.mxu0 %v606
    %631 = vmatprep.subr.mxu0 0.0
    %632 = vmatpush1.msra.mxu0 %v608
    %633 = vmatprep.subr.mxu0 0.0
    %634 = vmatpush1.msra.mxu0 0.0
    %635 = vmatprep.subr.mxu0 0.0
    %636 = vmatpush1.msra.mxu0 0.0
    %637 = vmatprep.subr.mxu0 0.0
    %638 = vmatpush1.msra.mxu0 0.0
    %639 = vmatprep.subr.mxu0 0.0
    %640 = vmatpush1.msra.mxu0 0.0
    %641 = vmatprep.subr.mxu0 0.0
    %642 = vmatpush1.msra.mxu0 0.0
    %643 = vmatprep.subr.mxu0 0.0
    %644 = vmatpush1.msra.mxu0 0.0
    %645 = vmatprep.subr.mxu0 0.0
    %646 = vmatpush1.msra.mxu0 0.0
    %647 = vmatprep.subr.mxu0 0.0
    %648 = vmatpush1.msra.mxu0 0.0
    %649 = vmatprep.subr.mxu0 0.0
    %650 = vmatpush1.msra.mxu0 0.0
    %651 = vmatprep.subr.mxu0 0.0
    %652 = vmatpush1.msra.mxu0 0.0
    %653 = vmatprep.subr.mxu0 0.0
    %654 = vmatpush1.msra.mxu0 0.0
    %655 = vmatprep.subr.mxu0 0.0
    %656 = vmatpush1.msra.mxu0 0.0
    %657 = vmatprep.subr.mxu0 0.0
    %658 = vmatpush1.msra.mxu0 0.0
    %659 = vmatprep.subr.mxu0 0.0
    %660 = vmatpush1.msra.mxu0 0.0
    %661 = vmatprep.subr.mxu0 0.0
    %662 = vmatpush1.msra.mxu0 0.0
    %663 = vmatprep.subr.mxu0 0.0
    %664 = vmatpush1.msra.mxu0 0.0
    %665 = vmatprep.subr.mxu0 0.0
    %666 = vmatpush1.msra.mxu0 0.0
    %667 = vmatprep.subr.mxu0 0.0
    %668 = vmatpush1.msra.mxu0 0.0
    %669 = vmatprep.subr.mxu0 0.0
    %670 = vmatpush1.msra.mxu0 0.0
    %671 = vmatprep.subr.mxu0 0.0
    %672 = vmatpush1.msra.mxu0 0.0
    %673 = vmatprep.subr.mxu0 0.0
    %674 = vmatpush1.msra.mxu0 0.0
    %675 = vmatprep.subr.mxu0 0.0
    %676 = vmatpush1.msra.mxu0 0.0
    %677 = vmatprep.subr.mxu0 0.0
    %678 = vmatpush1.msra.mxu0 0.0
    %679 = vmatprep.subr.mxu0 0.0
    %680 = vmatpush1.msra.mxu0 0.0
    %681 = vmatprep.subr.mxu0 0.0
    %682 = vmatpush1.msra.mxu0 0.0
    %683 = vmatprep.subr.mxu0 0.0
    %684 = vmatpush1.msra.mxu0 0.0
    %685 = vmatprep.subr.mxu0 0.0
    %686 = vmatpush1.msra.mxu0 0.0
    %687 = vmatprep.subr.mxu0 0.0
    %688 = vmatpush1.msra.mxu0 0.0
    %689 = vmatprep.mubr.f32.mxu0 0.0
    %690 = vmatmul.mubr.f32.gmra.mrb[0].mxu0 %v614
    %v691 = vpop.f32.mrb[0].mxu0
    %v692 = vadd.f32 0.0, %v691
    %v693 = vpop.f32.mrb[0].mxu0
    %694 = vmatprep.mubr.f32.mxu0 0.0
    %695 = vmatmul.mubr.f32.gmra.mrb[0].mxu0 %v617
    %v696 = vpop.f32.mrb[0].mxu0
    %v697 = vadd.f32 0.0, %v696
    %v698 = vpop.f32.mrb[0].mxu0
    %699 = vmatprep.mubr.f32.mxu0 0.0
    %700 = vmatmul.mubr.f32.gmra.mrb[0].mxu0 %v620
    %v701 = vpop.f32.mrb[0].mxu0
    %v702 = vadd.f32 0.0, %v701
    %v703 = vpop.f32.mrb[0].mxu0
    %704 = vmatprep.mubr.f32.mxu0 0.0
    %705 = vmatmul.mubr.f32.gmra.mrb[0].mxu0 %v623
    %v706 = vpop.f32.mrb[0].mxu0
    %v707 = vadd.f32 0.0, %v706
    %v708 = vpop.f32.mrb[0].mxu0
    %709 = vdwg.mxu0
    %v710 = vld [vmem:[%s2] sm:$0xff]
    %v711 = vld [vmem:[%s2 + $0x8] sm:$0xff]
    %v712 = vld [vmem:[%s2 + $0x10] sm:$0xff]
    %v713 = vld [vmem:[%s2 + $0x18] sm:$0xff]
    %v714 = vmul.f32 %v583, %v710
    %v715 = vmul.f32 %v588, %v711
    %v716 = vmul.f32 %v593, %v712
    %v717 = vmul.f32 %v598, %v713
    %v718 = vmul.f32 %v692, %v710
    %v719 = vmul.f32 %v697, %v711
    %v720 = vmul.f32 %v702, %v712
    %v721 = vmul.f32 %v707, %v713
    %v722 = vrcp.pop %v470
    %v723 = vmul.f32 1.0, %v722
    %v724 = vrcp.pop %v473
    %v725 = vmul.f32 1.0, %v724
    %v726 = vrcp.pop %v476
    %v727 = vmul.f32 1.0, %v726
    %v728 = vrcp.pop %v479
    %v729 = vmul.f32 1.0, %v728
    %v730 = vrcp.pop %v482
    %v731 = vmul.f32 1.0, %v730
    %v732 = vrcp.pop %v485
    %v733 = vmul.f32 1.0, %v732
    %v734 = vrcp.pop %v488
    %v735 = vmul.f32 1.0, %v734
    %v736 = vrcp.pop %v491
    %v737 = vmul.f32 1.0, %v736
    %v738 = vmul.f32 %v714, %v723
    %v739 = vmul.f32 %v715, %v725
    %v740 = vmul.f32 %v716, %v727
    %v741 = vmul.f32 %v717, %v729
    %v742 = vmul.f32 %v718, %v731
    %v743 = vmul.f32 %v719, %v733
    %v744 = vmul.f32 %v720, %v735
    %v745 = vmul.f32 %v721, %v737
    %v746 = vsel %vm151, %v738, 0.0
    %v747 = vsel %vm151, %v739, 0.0
    %v748 = vadd.f32 %v746, %v747
    %v749 = vsel %vm151, %v740, 0.0
    %v750 = vadd.f32 %v748, %v749
    %v751 = vsel %vm151, %v741, 0.0
    %v752 = vadd.f32 %v750, %v751
    %v753 = vsel %vm151, %v742, 0.0
    %v754 = vsel %vm151, %v743, 0.0
    %v755 = vadd.f32 %v753, %v754
    %v756 = vsel %vm151, %v744, 0.0
    %v757 = vadd.f32 %v755, %v756
    %v758 = vsel %vm151, %v745, 0.0
    %v759 = vadd.f32 %v757, %v758
    %v760 = vsel %vm151, %v752, 0.0
    %761 = vadd.xlane.f32.xlu0 %v760
    %v762 = vpop.xlane.xlu0 %761
    %v763 = vsel %vm151, %v759, 0.0
    %764 = vadd.xlane.f32.xlu0 %v763
    %v765 = vpop.xlane.xlu0 %764
    %v766 = vld [vmem:[%s5] sm:$0x1]
    %v768 = vlaneseq
    %v769 = vshrl.u32 %v768, 7
    %v770 = vsub.s32 0, %v769
    %v771 = vrot.slane %v766, %v770
    %v775 = vlaneseq
    %v776 = vand.u32 %v775, 127
    %v777 = vlaneseq
    %v778 = vshrl.u32 %v777, 7
    %v779 = vsub.s32 %v776, %v778
    %v780 = vrot.slane %v762, %v779
    %v781 = vlaneseq
    %v782 = vshrl.u32 %v781, 7
    %v783 = vsub.s32 %v776, %v782
    %v784 = vrot.slane %v765, %v783
    %vm785 = vcmask 1041409
    %v786 = vsel %vm785, %v784, %v780
    %v788 = vsel %vm139, %v786, %v771
    %vm789 = vcmask 58368
    %v790 = vsel %vm789, %v788, -inf
    %791 = vmax.xlane.f32.xlu0 %v790
    %v792 = vpop.xlane.xlu0 %791
    %v793 = vsub.f32 %v788, %v792
    %v794 = vmul.f32 %v793, 1.442695
    %v795 = vpow.pop %v794
    %v796 = vsel %vm789, %v795, 0.0
    %797 = vadd.xlane.f32.xlu0 %v796
    %v798 = vpop.xlane.xlu0 %797
    %v799 = vrcp.pop %v798
    %v800 = vmul.f32 %v795, %v799
    %801 = vst.msk [vmem:[#allocation5] sm:$0x3] %vm789, %v800
    // Predicated region
    $region30: #{tpu_custom_call.1} parent=1 // pred_check
      _
    $region31: #{tpu_custom_call.1} parent=1 // pred_check_branch
      %803 = sbr.rel (0) target = $region33
    $region32: #{tpu_custom_call.1} parent=1 // pred_region
      %s805 = ssub.s32 32, 32
      %806 = vsyncadd [#allocation4], %s805
      %s808 = sshll.u32 [#allocation5], 4
      %s809 = int_to_ptr.vmem [resolvable:$true] %s808
      %811 = dma.vmem_to_hbm [thread:$0]  %s809, 32, %s6, [#allocation4]
    $region33: #{tpu_custom_call.1} parent=1 // pred_fallthru
      _
    // Predicated region
    $region34: #{tpu_custom_call.1} parent=1 // pred_check
      _
    $region35: #{tpu_custom_call.1} parent=1 // pred_check_branch
      %813 = sbr.rel (0) target = $region37
    $region36: #{tpu_custom_call.1} parent=1 // pred_region
      %814 = dma.done [#allocation4], 32
    $region37: #{tpu_custom_call.1} parent=1 // pred_fallthru
      _
    %815 = vsyncpa [#allocation3], 1
    %816 = vsyncpa [#allocation4], 1

</llo_original>
